<compile_context>
chip_gen: v6e
topology: v6e:2x2x1
jax: 0.10.0
libtpu: 0.0.40
codegen_flags: <defaults>
</compile_context>

<pallas_src>
import jax
import jax.numpy as jnp
from jax.experimental import pallas as pl
from jax.experimental.pallas import tpu as pltpu


def _identity_copy_kernel(x_ref, o_ref):
    # Pure per-tile copy; the binding resource is DMA/HBM bandwidth only.
    o_ref[...] = x_ref[...]


_TARGET_BLOCK_BYTES = 4 * 1024 * 1024    # ~4 MiB/block; 4 live buffers ~ 16 MiB
_VMEM_LIMIT_BYTES = 32 * 1024 * 1024     # raises v5e's 16 MiB default, safe on v6e/v7x
_MIN_BYTES_FOR_SPLIT = 1 * 1024 * 1024   # don't add grid steps for tiny tensors


def _sublane_pack(dtype) -> int:
    """Row-count multiple required by sub-32-bit sublane packing."""
    itemsize = jnp.dtype(dtype).itemsize
    return max(8, (32 // (8 * itemsize)) * 8)   # f32 -> 8, bf16 -> 16, int8 -> 32


def _lane_dense_2d(total: int):
    """Pick (rows, cols) with cols a large multiple of 128 that divides total."""
    candidates = (2048, 1024, 4096, 512, 256, 128)
    # Prefer a factorization with at least one full sublane group of rows.
    for cols in candidates:
        if total % cols == 0 and total // cols >= 8:
            return total // cols, cols
    for cols in candidates:
        if total % cols == 0:
            return total // cols, cols
    return None


def identity_pallas(x: jax.Array) -> jax.Array:
    """Identity forward pass: returns an array identical to x."""
    if x.size == 0:
        return x  # nothing to move

    orig_shape = x.shape
    dtype = x.dtype
    itemsize = jnp.dtype(dtype).itemsize
    total = x.size

    # ---- lane-dense 2D view -------------------------------------------------
    shape2d = _lane_dense_2d(total)
    if shape2d is None:
        # No 128-multiple factor: fall back to a single full-extent block if it
        # fits the byte budget, otherwise keep the original last dim (block's
        # last dim then equals the full array dim, which is always legal).
        if total * itemsize <= _TARGET_BLOCK_BYTES:
            shape2d = (1, total)
        elif x.ndim >= 2:
            shape2d = (total // x.shape[-1], x.shape[-1])
        else:
            shape2d = (total, 1)
    R, C = shape2d
    x2 = x.reshape(R, C)

    # ---- byte-budget row tiling ---------------------------------------------
    pack = _sublane_pack(dtype)
    row_bytes = C * itemsize
    tile_r = max(1, _TARGET_BLOCK_BYTES // row_bytes)
    if tile_r >= R:
        tile_r = R                                   # full extent: always valid
    else:
        tile_r = max(pack, (tile_r // pack) * pack)  # keep sublane packing
        tile_r = min(tile_r, R)

    # v7x megacore: prefer >= 2 grid steps so the "parallel" axis can shard
    # across both TensorCores — but only when the array is big enough that the
    # per-step grid overhead (~0.35 us) is amortized.
    if (tile_r == R and R >= 2 * pack
            and total * itemsize >= _MIN_BYTES_FOR_SPLIT):
        half = (((R + 1) // 2) + pack - 1) // pack * pack
        tile_r = min(half, R)

    grid_r = pl.cdiv(R, tile_r)

    out2 = pl.pallas_call(
        _identity_copy_kernel,
        out_shape=jax.ShapeDtypeStruct((R, C), dtype),
        grid_spec=pltpu.PrefetchScalarGridSpec(
            num_scalar_prefetch=0,
            grid=(grid_r,),
            in_specs=[pl.BlockSpec((tile_r, C), lambda i: (i, 0))],
            out_specs=pl.BlockSpec((tile_r, C), lambda i: (i, 0)),
        ),
        compiler_params=pltpu.CompilerParams(
            dimension_semantics=("parallel",),
            vmem_limit_bytes=_VMEM_LIMIT_BYTES,
        ),
        cost_estimate=pl.CostEstimate(
            flops=0,
            transcendentals=0,
            bytes_accessed=2 * total * itemsize,
        ),
        input_output_aliases={0: 0},
    )(x2)

    return out2.reshape(orig_shape)


if __name__ == "__main__":
    key = jax.random.PRNGKey(0)
    # Small NCHW input consistent with how Identity is used inside DLA blocks.
    x = jax.random.normal(key, (2, 4, 16, 16), dtype=jnp.float32)

    y = identity_pallas(x)
    y = jax.block_until_ready(y)

    assert y.shape == x.shape
    assert y.dtype == x.dtype
    assert bool(jnp.all(y == x))

    print("KERNEL_OK")
</pallas_src>

<mosaic_0001>
module attributes {stable_mosaic.version = 11 : i64} {
  func.func @_identity_copy_kernel(%arg0: i32, %arg1: memref<8x256xf32, #tpu.memory_space<vmem>>, %arg2: memref<8x256xf32, #tpu.memory_space<vmem>>) attributes {dimension_semantics = [#tpu.dimension_semantics<parallel>], iteration_bounds = array<i64: 1>, scalar_prefetch = 0 : i64, scratch_operands = 0 : i64, tpu.core_type = #tpu.core_type<tc>, window_params = [{transform_indices = @transform_0, window_bounds = array<i64: 8, 256>}, {transform_indices = @transform_1, window_bounds = array<i64: 8, 256>}]} {
    %c0 = arith.constant 0 : index
    %c0_0 = arith.constant 0 : index
    %0 = vector.load %arg1[%c0, %c0_0] : memref<8x256xf32, #tpu.memory_space<vmem>>, vector<8x256xf32>
    %c0_1 = arith.constant 0 : index
    %c0_2 = arith.constant 0 : index
    %1 = vector.load %arg2[%c0_1, %c0_2] : memref<8x256xf32, #tpu.memory_space<vmem>>, vector<8x256xf32>
    tpu.vector_store %arg2[%c0_1, %c0_2], %0 {strides = array<i32>} : memref<8x256xf32, #tpu.memory_space<vmem>>, vector<8x256xf32>,
    return
  }
  func.func @transform_0(%arg0: i32) -> (i32, i32) {
    %c0_i32 = arith.constant 0 : i32
    %c0_i32_0 = arith.constant 0 : i32
    return %arg0, %c0_i32 : i32, i32
  }
  func.func @transform_1(%arg0: i32) -> (i32, i32) {
    %c0_i32 = arith.constant 0 : i32
    %c0_i32_0 = arith.constant 0 : i32
    return %arg0, %c0_i32 : i32, i32
  }
}

</mosaic_0001>

<llo_original>
// kernel: tpu_custom_call.1
$region0: #{tpu_custom_call.1}
  #allocation0 [shape = 'u32[]', space=smem, size = 0x4, offset = 0x4, fixed_abs, tag = 'smem constant byte address 0x4 - core index']
  #allocation1 [shape = 'u32[144,128]{1,0:T(1,128)}', space=vmem, size = 0x12000, scoped, tag = 'internal scratch']
  %s0 = inlined_call_operand.hbm [shape: f32[8,256], index: 0, kind: input, shape index: {}, may-alias: {0,1}]
  %s1 = inlined_call_operand.hbm [shape: f32[8,256], index: 1, kind: output, shape index: {}, may-alias: {0,1}]
  %s2 = sld [smem:[#allocation0]]
  $region18: #{tpu_custom_call.1} parent=0
    _
  %s4 = ssub.s32 1, %s2
  %s5 = scalar_select 0, %s4, %s2
  $region1: #{tpu_custom_call.1} parent=0
    #allocation2 [shape = 'u8[8192]{0}', space=vmem, size = 0x2000, scoped, tag = 'input window, operand 0, single buffered']
    #allocation3 [shape = 's32[1]{0}', space=sflag, size = 0x4, scoped, tag = 'scoped memory for tpu_custom_call.1']
    #allocation4 [shape = 's32[1]{0}', space=sflag, size = 0x4, scoped, tag = 'scoped memory for tpu_custom_call.1']
    #allocation5 [shape = 'u8[8192]{0}', space=vmem, size = 0x2000, scoped, tag = 'output window, operand 0, single buffered']
    %6 = vsyncpa [#allocation3], 0
    %7 = vsyncpa [#allocation4], 0
    // Predicated region
    $region2: #{tpu_custom_call.1} parent=1 // pred_check
      _
    $region3: #{tpu_custom_call.1} parent=1 // pred_check_branch
      %9 = sbr.rel (0) target = $region5
    $region4: #{tpu_custom_call.1} parent=1 // pred_region
      %s11 = ssub.s32 256, 256
      %12 = vsyncadd [#allocation3], %s11
      %s14 = sshll.u32 [#allocation2], 4
      %s15 = int_to_ptr.vmem [resolvable:$true] %s14
      %17 = dma.hbm_to_vmem [thread:$0]  %s0, 256, %s15, [#allocation3]
    $region5: #{tpu_custom_call.1} parent=1 // pred_fallthru
      _
    // Predicated region
    $region6: #{tpu_custom_call.1} parent=1 // pred_check
      _
    $region7: #{tpu_custom_call.1} parent=1 // pred_check_branch
      %19 = sbr.rel (0) target = $region9
    $region8: #{tpu_custom_call.1} parent=1 // pred_region
      %20 = dma.done [#allocation3], 256
    $region9: #{tpu_custom_call.1} parent=1 // pred_fallthru
      _
    %v21 = vld [vmem:[#allocation2] sm:$0xff]
    %v22 = vld [vmem:[#allocation2 + $0x8] sm:$0xff]
    %23 = vst [vmem:[#allocation5] sm:$0xff] %v21
    %24 = vst [vmem:[#allocation5 + $0x8] sm:$0xff] %v22
    // Predicated region
    $region10: #{tpu_custom_call.1} parent=1 // pred_check
      _
    $region11: #{tpu_custom_call.1} parent=1 // pred_check_branch
      %26 = sbr.rel (0) target = $region13
    $region12: #{tpu_custom_call.1} parent=1 // pred_region
      %s28 = ssub.s32 256, 256
      %29 = vsyncadd [#allocation4], %s28
      %s31 = sshll.u32 [#allocation5], 4
      %s32 = int_to_ptr.vmem [resolvable:$true] %s31
      %34 = dma.vmem_to_hbm [thread:$0]  %s32, 256, %s1, [#allocation4]
    $region13: #{tpu_custom_call.1} parent=1 // pred_fallthru
      _
    // Predicated region
    $region14: #{tpu_custom_call.1} parent=1 // pred_check
      _
    $region15: #{tpu_custom_call.1} parent=1 // pred_check_branch
      %36 = sbr.rel (0) target = $region17
    $region16: #{tpu_custom_call.1} parent=1 // pred_region
      %37 = dma.done [#allocation4], 256
    $region17: #{tpu_custom_call.1} parent=1 // pred_fallthru
      _
    %38 = vsyncpa [#allocation3], 1
    %39 = vsyncpa [#allocation4], 1

</llo_original>
